<compile_context>
chip_gen: v7x
topology: tpu7x:2x2x1
jax: 0.10.0
libtpu: 0.0.40
codegen_flags: <defaults>
</compile_context>

<pallas_src>
import functools

import jax
import jax.numpy as jnp
from jax.experimental import pallas as pl
from jax.experimental.pallas import tpu as pltpu


def _round_up(x, m):
    return ((x + m - 1) // m) * m


def dqn_dueling_kernel(x_ref, w1_ref, b1_ref, wva_ref, bva_ref, wc_ref, bc_ref,
                       q_ref, *, relu_in_bf16):
    x = x_ref[...]                                               # (TB, state) bf16

    # h = relu(fc1(x))                                           (TB, hidden)
    h = jnp.dot(x, w1_ref[...], preferred_element_type=jnp.float32) + b1_ref[...]
    if relu_in_bf16:
        # ReLU commutes with the bf16 cast; packed bf16 max halves VALU work
        # on v6e/v7x. (Use relu_in_bf16=False on v5e: no bf16 VPU.)
        h = jnp.maximum(h.astype(jnp.bfloat16), jnp.bfloat16(0))
    else:
        h = jnp.maximum(h, 0.0).astype(jnp.bfloat16)

    # [v | a] = relu(h @ [Wv1 | Wa1] + [bv1 | ba1])              (TB, 2*inner)
    va = jnp.dot(h, wva_ref[...], preferred_element_type=jnp.float32) + bva_ref[...]
    if relu_in_bf16:
        va = jnp.maximum(va.astype(jnp.bfloat16), jnp.bfloat16(0))
    else:
        va = jnp.maximum(va, 0.0).astype(jnp.bfloat16)

    # Q = [v | a] @ Wc + bc   (dueling V + A - mean(A) already folded in Wc/bc)
    q = jnp.dot(va, wc_ref[...], preferred_element_type=jnp.float32) + bc_ref[...]
    q_ref[...] = q.astype(q_ref.dtype)


def prepare_params(params):
    """One-time weight fusion + bf16 casts, hoisted out of the per-call path."""
    (w1, b1, wv1, bv1, wv2, bv2, wa1, ba1, wa2, ba2) = params
    n = wa2.shape[1]

    # Fuse the two stream first layers into a single matmul operand.
    wva = jnp.concatenate([wv1, wa1], axis=1)                    # (hidden, 2*inner)
    bva = jnp.concatenate([bv1, ba1], axis=1)                    # (1, 2*inner)

    # Fold "Q = V + A - mean(A, axis=1)" into one head weight / bias.
    center = jnp.eye(n, dtype=jnp.float32) - jnp.full((n, n), 1.0 / n, jnp.float32)
    ones_row = jnp.ones((1, n), dtype=jnp.float32)
    wc = jnp.concatenate([wv2 @ ones_row, wa2 @ center], axis=0)  # (2*inner, n)
    bc = bv2 @ ones_row + ba2 @ center                            # (1, n)

    # bf16 matmul operands (native MXU rate); biases stay f32 and are added to
    # the f32 accumulator. Keep wc/bc in f32 instead if tighter parity with the
    # f32 reference is required (the final matmul is tiny either way).
    return (w1.astype(jnp.bfloat16), b1,
            wva.astype(jnp.bfloat16), bva,
            wc.astype(jnp.bfloat16), bc)


def dqn_dueling_forward(x, fused_params, *, block_b=2048, relu_in_bf16=True):
    """x: (B, state_dim) f32. fused_params: output of prepare_params()."""
    w1, b1, wva, bva, wc, bc = fused_params
    B, state_dim = x.shape
    hidden = w1.shape[1]
    two_inner = wva.shape[1]
    action_dim = wc.shape[1]

    x_b = x.astype(jnp.bfloat16)

    # ---- batch tiling -------------------------------------------------------
    # 16-row granularity (bf16 sublane pack). For big batches use 256-row
    # (MXU macro-tile) multiples, capped at ceil(B/2) so the grid has >= 2
    # steps (v7x: the "parallel" axis can then shard across both TensorCores).
    b16 = _round_up(B, 16)
    if b16 <= 256:
        tb = b16
    else:
        half = max(256, _round_up((b16 + 1) // 2, 256))
        tb = min(_round_up(min(block_b, b16), 256), half)
    b_pad = _round_up(b16, tb)
    if b_pad != B:
        x_b = jnp.pad(x_b, ((0, b_pad - B), (0, 0)))   # zero tail rows; sliced off
    grid = (b_pad // tb,)

    def const_spec(arr):
        # Same block every grid step -> DMA'd once, stays resident in VMEM.
        # (pl.Buffered(1) could halve these buffers' footprint, but the fused
        # weights are <1 MiB at default dims, so default buffering is kept for
        # maximum lowering compatibility.)
        return pl.BlockSpec(arr.shape, lambda i: (0, 0))

    flops = 2 * b_pad * (state_dim * hidden + hidden * two_inner
                         + two_inner * action_dim)
    bytes_accessed = (x_b.size * 2 + w1.size * 2 + wva.size * 2 + wc.size * 2
                      + (b1.size + bva.size + bc.size) * 4
                      + b_pad * action_dim * 4)

    kernel = functools.partial(dqn_dueling_kernel, relu_in_bf16=relu_in_bf16)

    q = pl.pallas_call(
        kernel,
        out_shape=jax.ShapeDtypeStruct((b_pad, action_dim), jnp.float32),
        grid=grid,
        in_specs=[
            pl.BlockSpec((tb, state_dim), lambda i: (i, 0)),   # x: tiled over batch
            const_spec(w1), const_spec(b1),
            const_spec(wva), const_spec(bva),
            const_spec(wc), const_spec(bc),
        ],
        # Narrow last dim kept as-is: the (tb, action_dim) block is contiguous
        # in HBM, so lane-padding to 128 would only multiply writeback bytes.
        out_specs=pl.BlockSpec((tb, action_dim), lambda i: (i, 0)),
        compiler_params=pltpu.CompilerParams(
            dimension_semantics=("parallel",),     # shard batch tiles across TCs
            vmem_limit_bytes=48 * 1024 * 1024,     # within v7x's 64 MiB physical VMEM
        ),
        cost_estimate=pl.CostEstimate(
            flops=flops, transcendentals=0, bytes_accessed=bytes_accessed),
    )(x_b, w1, b1, wva, bva, wc, bc)

    return q[:B]


def init_params(key, state_dim, action_dim, hidden_dim=256, inner_dim=256):
    """Deterministic synthetic parameters.

    Weights are stored as (in_features, out_features) — i.e. the transpose of
    PyTorch's nn.Linear weight layout — so the math is x @ W + b.
    """
    keys = jax.random.split(key, 10)

    def lin(kw, kb, fan_in, fan_out):
        bound = 1.0 / jnp.sqrt(jnp.float32(fan_in))
        w = jax.random.uniform(kw, (fan_in, fan_out), jnp.float32, -bound, bound)
        b = jax.random.uniform(kb, (1, fan_out), jnp.float32, -bound, bound)
        return w, b

    w1, b1 = lin(keys[0], keys[1], state_dim, hidden_dim)        # fc1
    wv1, bv1 = lin(keys[2], keys[3], hidden_dim, inner_dim)      # fc_value
    wv2, bv2 = lin(keys[4], keys[5], inner_dim, 1)               # value
    wa1, ba1 = lin(keys[6], keys[7], hidden_dim, inner_dim)      # fc_advantages
    wa2, ba2 = lin(keys[8], keys[9], inner_dim, action_dim)      # advantages
    return (w1, b1, wv1, bv1, wv2, bv2, wa1, ba1, wa2, ba2)


def reference_forward(x, params):
    (w1, b1, wv1, bv1, wv2, bv2, wa1, ba1, wa2, ba2) = params
    h = jax.nn.relu(x @ w1 + b1)
    v = jax.nn.relu(h @ wv1 + bv1)
    V = v @ wv2 + bv2
    a = jax.nn.relu(h @ wa1 + ba1)
    A = a @ wa2 + ba2
    return V + A - jnp.mean(A, axis=1, keepdims=True)


if __name__ == "__main__":
    B, STATE_DIM, ACTION_DIM, HIDDEN_DIM, INNER_DIM = 2, 16, 4, 32, 32

    key = jax.random.PRNGKey(0)
    k_x, k_p = jax.random.split(key)
    x = jax.random.normal(k_x, (B, STATE_DIM), dtype=jnp.float32)
    params = init_params(k_p, STATE_DIM, ACTION_DIM,
                         hidden_dim=HIDDEN_DIM, inner_dim=INNER_DIM)

    # One-time parameter preparation (hoisted out of the per-call hot path).
    fused = prepare_params(params)
    fused = jax.block_until_ready(fused)

    q = dqn_dueling_forward(x, fused)
    q = jax.block_until_ready(q)

    q_ref = reference_forward(x, params)
    assert q.shape == (B, ACTION_DIM)
    # bf16 matmul operands -> relaxed tolerance vs the f32 reference.
    assert jnp.allclose(q, q_ref, atol=5e-2, rtol=5e-2), (q, q_ref)

    print("KERNEL_OK")
</pallas_src>

<mosaic_0001>
module attributes {stable_mosaic.version = 11 : i64} {
  func.func @dqn_dueling_kernel(%arg0: i32, %arg1: memref<16x16xbf16, #tpu.memory_space<vmem>>, %arg2: memref<16x32xbf16, #tpu.memory_space<vmem>>, %arg3: memref<1x32xf32, #tpu.memory_space<vmem>>, %arg4: memref<32x64xbf16, #tpu.memory_space<vmem>>, %arg5: memref<1x64xf32, #tpu.memory_space<vmem>>, %arg6: memref<64x4xbf16, #tpu.memory_space<vmem>>, %arg7: memref<1x4xf32, #tpu.memory_space<vmem>>, %arg8: memref<16x4xf32, #tpu.memory_space<vmem>>) attributes {dimension_semantics = [#tpu.dimension_semantics<parallel>], iteration_bounds = array<i64: 1>, scalar_prefetch = 0 : i64, scratch_operands = 0 : i64, tpu.core_type = #tpu.core_type<tc>, window_params = [{transform_indices = @transform_0, window_bounds = array<i64: 16, 16>}, {pipeline_mode = #tpu.pipeline_mode<synchronous>, transform_indices = @transform_1, window_bounds = array<i64: 16, 32>}, {pipeline_mode = #tpu.pipeline_mode<synchronous>, transform_indices = @transform_2, window_bounds = array<i64: 1, 32>}, {pipeline_mode = #tpu.pipeline_mode<synchronous>, transform_indices = @transform_3, window_bounds = array<i64: 32, 64>}, {pipeline_mode = #tpu.pipeline_mode<synchronous>, transform_indices = @transform_4, window_bounds = array<i64: 1, 64>}, {pipeline_mode = #tpu.pipeline_mode<synchronous>, transform_indices = @transform_5, window_bounds = array<i64: 64, 4>}, {pipeline_mode = #tpu.pipeline_mode<synchronous>, transform_indices = @transform_6, window_bounds = array<i64: 1, 4>}, {transform_indices = @transform_7, window_bounds = array<i64: 16, 4>}]} {
    %c0 = arith.constant 0 : index
    %c0_0 = arith.constant 0 : index
    %0 = vector.load %arg1[%c0, %c0_0] : memref<16x16xbf16, #tpu.memory_space<vmem>>, vector<16x16xbf16>
    %c0_1 = arith.constant 0 : index
    %c0_2 = arith.constant 0 : index
    %1 = vector.load %arg2[%c0_1, %c0_2] : memref<16x32xbf16, #tpu.memory_space<vmem>>, vector<16x32xbf16>
    %cst = arith.constant dense<0.000000e+00> : vector<16x32xf32>
    %2 = tpu.matmul %0, %1, %cst {dimension_numbers = #tpu.dot_dimension_numbers<[1], [0], [0], [1], [0, 0, 1, 1], [], []>} : vector<16x16xbf16>, vector<16x32xbf16>, vector<16x32xf32> -> vector<16x32xf32>
    %c0_3 = arith.constant 0 : index
    %c0_4 = arith.constant 0 : index
    %3 = vector.load %arg3[%c0_3, %c0_4] : memref<1x32xf32, #tpu.memory_space<vmem>>, vector<1x32xf32>
    %4 = vector.broadcast %3 : vector<1x32xf32> to vector<16x32xf32>
    %5 = arith.addf %2, %4 : vector<16x32xf32>
    %6 = arith.truncf %5 : vector<16x32xf32> to vector<16x32xbf16>
    %cst_5 = arith.constant 0.000000e+00 : bf16
    %7 = vector.broadcast %cst_5 : bf16 to vector<16x32xbf16>
    %8 = arith.maximumf %6, %7 : vector<16x32xbf16>
    %c0_6 = arith.constant 0 : index
    %c0_7 = arith.constant 0 : index
    %9 = vector.load %arg4[%c0_6, %c0_7] : memref<32x64xbf16, #tpu.memory_space<vmem>>, vector<32x64xbf16>
    %cst_8 = arith.constant dense<0.000000e+00> : vector<16x64xf32>
    %10 = tpu.matmul %8, %9, %cst_8 {dimension_numbers = #tpu.dot_dimension_numbers<[1], [0], [0], [1], [0, 0, 1, 1], [], []>} : vector<16x32xbf16>, vector<32x64xbf16>, vector<16x64xf32> -> vector<16x64xf32>
    %c0_9 = arith.constant 0 : index
    %c0_10 = arith.constant 0 : index
    %11 = vector.load %arg5[%c0_9, %c0_10] : memref<1x64xf32, #tpu.memory_space<vmem>>, vector<1x64xf32>
    %12 = vector.broadcast %11 : vector<1x64xf32> to vector<16x64xf32>
    %13 = arith.addf %10, %12 : vector<16x64xf32>
    %14 = arith.truncf %13 : vector<16x64xf32> to vector<16x64xbf16>
    %cst_11 = arith.constant 0.000000e+00 : bf16
    %15 = vector.broadcast %cst_11 : bf16 to vector<16x64xbf16>
    %16 = arith.maximumf %14, %15 : vector<16x64xbf16>
    %c0_12 = arith.constant 0 : index
    %c0_13 = arith.constant 0 : index
    %17 = vector.load %arg6[%c0_12, %c0_13] : memref<64x4xbf16, #tpu.memory_space<vmem>>, vector<64x4xbf16>
    %cst_14 = arith.constant dense<0.000000e+00> : vector<16x4xf32>
    %18 = tpu.matmul %16, %17, %cst_14 {dimension_numbers = #tpu.dot_dimension_numbers<[1], [0], [0], [1], [0, 0, 1, 1], [], []>} : vector<16x64xbf16>, vector<64x4xbf16>, vector<16x4xf32> -> vector<16x4xf32>
    %c0_15 = arith.constant 0 : index
    %c0_16 = arith.constant 0 : index
    %19 = vector.load %arg7[%c0_15, %c0_16] : memref<1x4xf32, #tpu.memory_space<vmem>>, vector<1x4xf32>
    %20 = vector.broadcast %19 : vector<1x4xf32> to vector<16x4xf32>
    %21 = arith.addf %18, %20 : vector<16x4xf32>
    %c0_17 = arith.constant 0 : index
    %c0_18 = arith.constant 0 : index
    %22 = vector.load %arg8[%c0_17, %c0_18] : memref<16x4xf32, #tpu.memory_space<vmem>>, vector<16x4xf32>
    tpu.vector_store %arg8[%c0_17, %c0_18], %21 {strides = array<i32>} : memref<16x4xf32, #tpu.memory_space<vmem>>, vector<16x4xf32>,
    return
  }
  func.func @transform_0(%arg0: i32) -> (i32, i32) {
    %c0_i32 = arith.constant 0 : i32
    %c0_i32_0 = arith.constant 0 : i32
    return %arg0, %c0_i32 : i32, i32
  }
  func.func @transform_1(%arg0: i32) -> (i32, i32) {
    %c0_i32 = arith.constant 0 : i32
    %c0_i32_0 = arith.constant 0 : i32
    %c0_i32_1 = arith.constant 0 : i32
    return %c0_i32, %c0_i32_0 : i32, i32
  }
  func.func @transform_2(%arg0: i32) -> (i32, i32) {
    %c0_i32 = arith.constant 0 : i32
    %c0_i32_0 = arith.constant 0 : i32
    %c0_i32_1 = arith.constant 0 : i32
    return %c0_i32, %c0_i32_0 : i32, i32
  }
  func.func @transform_3(%arg0: i32) -> (i32, i32) {
    %c0_i32 = arith.constant 0 : i32
    %c0_i32_0 = arith.constant 0 : i32
    %c0_i32_1 = arith.constant 0 : i32
    return %c0_i32, %c0_i32_0 : i32, i32
  }
  func.func @transform_4(%arg0: i32) -> (i32, i32) {
    %c0_i32 = arith.constant 0 : i32
    %c0_i32_0 = arith.constant 0 : i32
    %c0_i32_1 = arith.constant 0 : i32
    return %c0_i32, %c0_i32_0 : i32, i32
  }
  func.func @transform_5(%arg0: i32) -> (i32, i32) {
    %c0_i32 = arith.constant 0 : i32
    %c0_i32_0 = arith.constant 0 : i32
    %c0_i32_1 = arith.constant 0 : i32
    return %c0_i32, %c0_i32_0 : i32, i32
  }
  func.func @transform_6(%arg0: i32) -> (i32, i32) {
    %c0_i32 = arith.constant 0 : i32
    %c0_i32_0 = arith.constant 0 : i32
    %c0_i32_1 = arith.constant 0 : i32
    return %c0_i32, %c0_i32_0 : i32, i32
  }
  func.func @transform_7(%arg0: i32) -> (i32, i32) {
    %c0_i32 = arith.constant 0 : i32
    %c0_i32_0 = arith.constant 0 : i32
    return %arg0, %c0_i32 : i32, i32
  }
}

</mosaic_0001>

<llo_original>
// kernel: tpu_custom_call.1
$region0: #{tpu_custom_call.1}
  #allocation0 [shape = 'u32[]', space=smem, size = 0x4, offset = 0x4, fixed_abs, tag = 'smem constant byte address 0x4 - core index']
  #allocation1 [shape = 'u32[144,128]{1,0:T(1,128)}', space=vmem, size = 0x12000, scoped, tag = 'internal scratch']
  %s0 = inlined_call_operand.vmem [shape: bf16[16,16], index: 0, kind: input, shape index: {}]
  %s1 = inlined_call_operand.vmem [shape: bf16[16,32], index: 1, kind: input, shape index: {}]
  %s2 = inlined_call_operand.vmem [shape: f32[1,32], index: 2, kind: input, shape index: {}]
  %s3 = inlined_call_operand.vmem [shape: bf16[32,64], index: 3, kind: input, shape index: {}]
  %s4 = inlined_call_operand.vmem [shape: f32[1,64], index: 4, kind: input, shape index: {}]
  %s5 = inlined_call_operand.vmem [shape: bf16[64,4], index: 5, kind: input, shape index: {}]
  %s6 = inlined_call_operand.vmem [shape: f32[1,4], index: 6, kind: input, shape index: {}]
  %s7 = inlined_call_operand.vmem [shape: f32[16,4], index: 7, kind: output, shape index: {}]
  %s8 = sld [smem:[#allocation0]]
  $region38: #{tpu_custom_call.1} parent=0
    _
  %s10 = ssub.s32 1, %s8
  %s11 = scalar_select 0, %s10, %s8
  // Predicated region
  $region2: #{tpu_custom_call.1} parent=0 // pred_check
    _
  $region3: #{tpu_custom_call.1} parent=0 // pred_check_branch
    %13 = sbr.rel (0) target = $region5
  $region4: #{tpu_custom_call.1} parent=0 // pred_region
    _
  $region5: #{tpu_custom_call.1} parent=0 // pred_fallthru
    _
  // Predicated region
  $region6: #{tpu_custom_call.1} parent=0 // pred_check
    _
  $region7: #{tpu_custom_call.1} parent=0 // pred_check_branch
    %15 = sbr.rel (0) target = $region9
  $region8: #{tpu_custom_call.1} parent=0 // pred_region
    _
  $region9: #{tpu_custom_call.1} parent=0 // pred_fallthru
    _
  // Predicated region
  $region10: #{tpu_custom_call.1} parent=0 // pred_check
    _
  $region11: #{tpu_custom_call.1} parent=0 // pred_check_branch
    %17 = sbr.rel (0) target = $region13
  $region12: #{tpu_custom_call.1} parent=0 // pred_region
    _
  $region13: #{tpu_custom_call.1} parent=0 // pred_fallthru
    _
  // Predicated region
  $region14: #{tpu_custom_call.1} parent=0 // pred_check
    _
  $region15: #{tpu_custom_call.1} parent=0 // pred_check_branch
    %19 = sbr.rel (0) target = $region17
  $region16: #{tpu_custom_call.1} parent=0 // pred_region
    _
  $region17: #{tpu_custom_call.1} parent=0 // pred_fallthru
    _
  // Predicated region
  $region18: #{tpu_custom_call.1} parent=0 // pred_check
    _
  $region19: #{tpu_custom_call.1} parent=0 // pred_check_branch
    %21 = sbr.rel (0) target = $region21
  $region20: #{tpu_custom_call.1} parent=0 // pred_region
    _
  $region21: #{tpu_custom_call.1} parent=0 // pred_fallthru
    _
  // Predicated region
  $region22: #{tpu_custom_call.1} parent=0 // pred_check
    _
  $region23: #{tpu_custom_call.1} parent=0 // pred_check_branch
    %23 = sbr.rel (0) target = $region25
  $region24: #{tpu_custom_call.1} parent=0 // pred_region
    _
  $region25: #{tpu_custom_call.1} parent=0 // pred_fallthru
    _
  // Predicated region
  $region26: #{tpu_custom_call.1} parent=0 // pred_check
    _
  $region27: #{tpu_custom_call.1} parent=0 // pred_check_branch
    %25 = sbr.rel (0) target = $region29
  $region28: #{tpu_custom_call.1} parent=0 // pred_region
    _
  $region29: #{tpu_custom_call.1} parent=0 // pred_fallthru
    _
  %v27 = vld [vmem:[%s0] sm:$0xf]
  %v28 = vld [vmem:[%s0 + $0x4] sm:$0xf]
  %v29 = vld [vmem:[%s1] sm:$0xf]
  %v30 = vld [vmem:[%s1 + $0x4] sm:$0xf]
  %v31 = vld [vmem:[%s2] sm:$0x1]
  %v33 = vlaneseq
  %v34 = vshrl.u32 %v33, 7
  %v35 = vsub.s32 0, %v34
  %v36 = vrot.slane %v31, %v35
  %v40 = vunpack.c.l.b16 %v27
  %v41 = vunpack.c.l.b16 %v28
  %v42 = vpack.c.b16 %v41, %v40
  %v45 = vunpack.c.l.b16 %v29
  %v46 = vunpack.c.l.b16 %v30
  %v47 = vpack.c.b16 %v46, %v45
  %vm49 = vcmask 130048
  %v51 = vsel %vm49, %v42, 0
  %53 = vmatprep.subr.bf16.mxu0 0
  %54 = vmatpush1.bf16.msra.mxu0 %v47
  %55 = vmatprep.subr.bf16.mxu0 0
  %56 = vmatpush1.bf16.msra.mxu0 0
  %57 = vmatprep.subr.bf16.mxu0 0
  %58 = vmatpush1.bf16.msra.mxu0 0
  %59 = vmatprep.subr.bf16.mxu0 0
  %60 = vmatpush1.bf16.msra.mxu0 0
  %61 = vmatprep.subr.bf16.mxu0 0
  %62 = vmatpush1.bf16.msra.mxu0 0
  %63 = vmatprep.subr.bf16.mxu0 0
  %64 = vmatpush1.bf16.msra.mxu0 0
  %65 = vmatprep.subr.bf16.mxu0 0
  %66 = vmatpush1.bf16.msra.mxu0 0
  %67 = vmatprep.subr.bf16.mxu0 0
  %68 = vmatpush1.bf16.msra.mxu0 0
  %69 = vmatprep.subr.bf16.mxu0 0
  %70 = vmatpush1.bf16.msra.mxu0 0
  %71 = vmatprep.subr.bf16.mxu0 0
  %72 = vmatpush1.bf16.msra.mxu0 0
  %73 = vmatprep.subr.bf16.mxu0 0
  %74 = vmatpush1.bf16.msra.mxu0 0
  %75 = vmatprep.subr.bf16.mxu0 0
  %76 = vmatpush1.bf16.msra.mxu0 0
  %77 = vmatprep.subr.bf16.mxu0 0
  %78 = vmatpush1.bf16.msra.mxu0 0
  %79 = vmatprep.subr.bf16.mxu0 0
  %80 = vmatpush1.bf16.msra.mxu0 0
  %81 = vmatprep.subr.bf16.mxu0 0
  %82 = vmatpush1.bf16.msra.mxu0 0
  %83 = vmatprep.subr.bf16.mxu0 0
  %84 = vmatpush1.bf16.msra.mxu0 0
  %85 = vmatprep.mubr.bf16.mxu0 0
  %86 = vmatmul.mubr.bf16.gmra.mrb[0].mxu0 %v51
  %v87 = vpop.f32.mrb[0].mxu0
  %v88 = vadd.f32 %v36, %v87
  %v89 = vpop.f32.mrb[0].mxu0
  %v90 = vpop.f32.mrb[0].mxu0
  %v91 = vadd.f32 %v36, %v90
  %v92 = vpop.f32.mrb[0].mxu0
  %93 = vdwg.mxu0
  %v94 = vpack.c.bf16 %v91, %v88
  %v95 = vmax.bf16 %v94, 0
  %v96 = vld [vmem:[%s3] sm:$0xf]
  %v97 = vld [vmem:[%s3 + $0x4] sm:$0xf]
  %v98 = vld [vmem:[%s3 + $0x8] sm:$0xf]
  %v99 = vld [vmem:[%s3 + $0xc] sm:$0xf]
  %v100 = vld [vmem:[%s4] sm:$0x1]
  %v102 = vlaneseq
  %v103 = vshrl.u32 %v102, 7
  %v104 = vsub.s32 0, %v103
  %v105 = vrot.slane %v100, %v104
  %v111 = vunpack.c.l.b16 %v96
  %v112 = vunpack.c.l.b16 %v97
  %v113 = vunpack.c.l.b16 %v98
  %v114 = vunpack.c.l.b16 %v99
  %v115 = vpack.c.b16 %v112, %v111
  %v116 = vpack.c.b16 %v114, %v113
  %vm119 = vcmask 261120
  %v121 = vsel %vm119, %v95, 0
  %123 = vmatprep.subr.bf16.mxu0 0
  %124 = vmatpush1.bf16.msra.mxu0 %v115
  %125 = vmatprep.subr.bf16.mxu0 0
  %126 = vmatpush1.bf16.msra.mxu0 %v116
  %127 = vmatprep.subr.bf16.mxu0 0
  %128 = vmatpush1.bf16.msra.mxu0 0
  %129 = vmatprep.subr.bf16.mxu0 0
  %130 = vmatpush1.bf16.msra.mxu0 0
  %131 = vmatprep.subr.bf16.mxu0 0
  %132 = vmatpush1.bf16.msra.mxu0 0
  %133 = vmatprep.subr.bf16.mxu0 0
  %134 = vmatpush1.bf16.msra.mxu0 0
  %135 = vmatprep.subr.bf16.mxu0 0
  %136 = vmatpush1.bf16.msra.mxu0 0
  %137 = vmatprep.subr.bf16.mxu0 0
  %138 = vmatpush1.bf16.msra.mxu0 0
  %139 = vmatprep.subr.bf16.mxu0 0
  %140 = vmatpush1.bf16.msra.mxu0 0
  %141 = vmatprep.subr.bf16.mxu0 0
  %142 = vmatpush1.bf16.msra.mxu0 0
  %143 = vmatprep.subr.bf16.mxu0 0
  %144 = vmatpush1.bf16.msra.mxu0 0
  %145 = vmatprep.subr.bf16.mxu0 0
  %146 = vmatpush1.bf16.msra.mxu0 0
  %147 = vmatprep.subr.bf16.mxu0 0
  %148 = vmatpush1.bf16.msra.mxu0 0
  %149 = vmatprep.subr.bf16.mxu0 0
  %150 = vmatpush1.bf16.msra.mxu0 0
  %151 = vmatprep.subr.bf16.mxu0 0
  %152 = vmatpush1.bf16.msra.mxu0 0
  %153 = vmatprep.subr.bf16.mxu0 0
  %154 = vmatpush1.bf16.msra.mxu0 0
  %155 = vmatprep.mubr.bf16.mxu0 0
  %156 = vmatmul.mubr.bf16.gmra.mrb[0].mxu0 %v121
  %v157 = vpop.f32.mrb[0].mxu0
  %v158 = vadd.f32 %v105, %v157
  %v159 = vpop.f32.mrb[0].mxu0
  %v160 = vpop.f32.mrb[0].mxu0
  %v161 = vadd.f32 %v105, %v160
  %v162 = vpop.f32.mrb[0].mxu0
  %163 = vdwg.mxu0
  %v164 = vpack.c.bf16 %v161, %v158
  %v165 = vmax.bf16 %v164, 0
  %v166 = vld [vmem:[%s5] sm:$0xf]
  %v167 = vld [vmem:[%s5 + $0x4] sm:$0xf]
  %v168 = vld [vmem:[%s5 + $0x8] sm:$0xf]
  %v169 = vld [vmem:[%s5 + $0xc] sm:$0xf]
  %v170 = vld [vmem:[%s5 + $0x10] sm:$0xf]
  %v171 = vld [vmem:[%s5 + $0x14] sm:$0xf]
  %v172 = vld [vmem:[%s5 + $0x18] sm:$0xf]
  %v173 = vld [vmem:[%s5 + $0x1c] sm:$0xf]
  %v174 = vld [vmem:[%s6] sm:$0x1]
  %v176 = vlaneseq
  %v177 = vshrl.u32 %v176, 7
  %v178 = vsub.s32 0, %v177
  %v179 = vrot.slane %v174, %v178
  %v189 = vunpack.c.l.b16 %v166
  %v190 = vunpack.c.l.b16 %v167
  %v191 = vunpack.c.l.b16 %v168
  %v192 = vunpack.c.l.b16 %v169
  %v193 = vunpack.c.l.b16 %v170
  %v194 = vunpack.c.l.b16 %v171
  %v195 = vunpack.c.l.b16 %v172
  %v196 = vunpack.c.l.b16 %v173
  %v197 = vpack.c.b16 %v190, %v189
  %v198 = vpack.c.b16 %v192, %v191
  %v199 = vpack.c.b16 %v194, %v193
  %v200 = vpack.c.b16 %v196, %v195
  %vm205 = vcmask 523264
  %v207 = vsel %vm205, %v165, 0
  %209 = vmatprep.subr.bf16.mxu0 0
  %210 = vmatpush1.bf16.msra.mxu0 %v197
  %211 = vmatprep.subr.bf16.mxu0 0
  %212 = vmatpush1.bf16.msra.mxu0 %v198
  %213 = vmatprep.subr.bf16.mxu0 0
  %214 = vmatpush1.bf16.msra.mxu0 %v199
  %215 = vmatprep.subr.bf16.mxu0 0
  %216 = vmatpush1.bf16.msra.mxu0 %v200
  %217 = vmatprep.subr.bf16.mxu0 0
  %218 = vmatpush1.bf16.msra.mxu0 0
  %219 = vmatprep.subr.bf16.mxu0 0
  %220 = vmatpush1.bf16.msra.mxu0 0
  %221 = vmatprep.subr.bf16.mxu0 0
  %222 = vmatpush1.bf16.msra.mxu0 0
  %223 = vmatprep.subr.bf16.mxu0 0
  %224 = vmatpush1.bf16.msra.mxu0 0
  %225 = vmatprep.subr.bf16.mxu0 0
  %226 = vmatpush1.bf16.msra.mxu0 0
  %227 = vmatprep.subr.bf16.mxu0 0
  %228 = vmatpush1.bf16.msra.mxu0 0
  %229 = vmatprep.subr.bf16.mxu0 0
  %230 = vmatpush1.bf16.msra.mxu0 0
  %231 = vmatprep.subr.bf16.mxu0 0
  %232 = vmatpush1.bf16.msra.mxu0 0
  %233 = vmatprep.subr.bf16.mxu0 0
  %234 = vmatpush1.bf16.msra.mxu0 0
  %235 = vmatprep.subr.bf16.mxu0 0
  %236 = vmatpush1.bf16.msra.mxu0 0
  %237 = vmatprep.subr.bf16.mxu0 0
  %238 = vmatpush1.bf16.msra.mxu0 0
  %239 = vmatprep.subr.bf16.mxu0 0
  %240 = vmatpush1.bf16.msra.mxu0 0
  %241 = vmatprep.mubr.bf16.mxu0 0
  %242 = vmatmul.mubr.bf16.gmra.mrb[0].mxu0 %v207
  %v243 = vpop.f32.mrb[0].mxu0
  %v244 = vadd.f32 %v179, %v243
  %v245 = vpop.f32.mrb[0].mxu0
  %v246 = vpop.f32.mrb[0].mxu0
  %v247 = vadd.f32 %v179, %v246
  %v248 = vpop.f32.mrb[0].mxu0
  %249 = vdwg.mxu0
  %vm250 = vcmask 31744
  %251 = vst.msk [vmem:[%s7] sm:$0xff] %vm250, %v244
  %252 = vst.msk [vmem:[%s7 + $0x8] sm:$0xff] %vm250, %v247
  // Predicated region
  $region30: #{tpu_custom_call.1} parent=0 // pred_check
    _
  $region31: #{tpu_custom_call.1} parent=0 // pred_check_branch
    %254 = sbr.rel (0) target = $region33
  $region32: #{tpu_custom_call.1} parent=0 // pred_region
    _
  $region33: #{tpu_custom_call.1} parent=0 // pred_fallthru
    _
  // Predicated region
  $region34: #{tpu_custom_call.1} parent=0 // pred_check
    _
  $region35: #{tpu_custom_call.1} parent=0 // pred_check_branch
    %256 = sbr.rel (0) target = $region37
  $region36: #{tpu_custom_call.1} parent=0 // pred_region
    _
  $region37: #{tpu_custom_call.1} parent=0 // pred_fallthru
    _

</llo_original>
